<compile_context>
chip_gen: v7x
topology: tpu7x:2x2x1
jax: 0.10.0
libtpu: 0.0.40
codegen_flags: <defaults>
</compile_context>

<pallas_src>
import math
import jax
import jax.numpy as jnp
from jax.experimental import pallas as pl
from jax.experimental.pallas import tpu as pltpu

# ---- model hyper-parameters (mirrors ScoreModel_Time_resnet_edm defaults) ----
SIGMA = 25.0
NDIM = 2
NLAYERS = 5
NHIDDEN = 50
TIME_EMBED_DIM = 10          # Fourier projection -> 5 sin + 5 cos
HALF = TIME_EMBED_DIM // 2
N_RES = NLAYERS - 2          # 3 residual blocks
LN_EPS = 1e-5                # torch.nn.LayerNorm default
PAD = 128                    # lane-dense feature slab width

COND_W = 8                   # packed per-row input: [x0, x1, ln_std, c_in, c_in2, inv_std, 0, 0]
N_ROWS = 16                  # packed (1, PAD)-row parameter stack height
N_MATS = 1 + N_RES + 1       # w1_emb, fw[0..2], wo

# row indices inside the packed row stack
R_WF, R_PHASE, R_B1, R_BO, R_W1X0, R_W1X1 = 0, 1, 2, 3, 4, 5
R_GAMMA, R_BETA, R_FB = 6, 9, 12


def _round_up(n, m):
    return ((n + m - 1) // m) * m


def _choose_tb(B, block_b):
    """Batch tile: multiple of 8, and >= 2 grid steps whenever B allows it."""
    if B <= 8:
        return _round_up(max(B, 1), 8)
    if B >= 2 * block_b:
        return block_b
    return min(block_b, _round_up((B + 1) // 2, 8))


def score_model_kernel(cond_ref, rows_ref, mats_ref, o_ref):
    """One batch tile of the full forward pass.

    cond_ref: (TB, 8)   packed [x0, x1, ln_std, c_in, c_in2, inv_std, 0, 0]
    rows_ref: (16, 128) stacked row params (fourier freqs, phase, b1, bo,
                        w1 x-rows, gamma*3, beta*3, fb*3), zero padded
    mats_ref: (5, 128, 128) stacked weight slabs (w1_emb, fw*3, wo), zero padded
    o_ref:    (TB, 8)   lanes 0..1 = prediction; lanes >= NDIM are discarded
    """
    f32 = jnp.float32
    mm_dtype = mats_ref.dtype            # f32 (exact) or bf16 (fast path)

    cond = cond_ref[...]                 # (TB, COND_W)
    ln_std = cond[:, 2:3]
    c_in = cond[:, 3:4]
    c_in2 = cond[:, 4:5]
    inv_std = cond[:, 5:6]

    rows = rows_ref[...]                 # (N_ROWS, PAD)
    wf = rows[R_WF:R_WF + 1]             # 2*pi*W in lanes 2..6 and 7..11, else 0
    phase = rows[R_PHASE:R_PHASE + 1]    # pi/2 on the cos lanes 7..11, else 0
    b1 = rows[R_B1:R_B1 + 1]
    bo = rows[R_BO:R_BO + 1]
    w1x0 = rows[R_W1X0:R_W1X0 + 1]       # first-layer weight rows for the 2 x features
    w1x1 = rows[R_W1X1:R_W1X1 + 1]

    def mm(a, w):                        # MXU matmul, f32 accumulation
        return jnp.dot(a.astype(mm_dtype), w, preferred_element_type=f32)

    # Gaussian Fourier embedding via the phase trick (cos(z) = sin(z + pi/2)):
    # lanes 2..6 carry sin, lanes 7..11 carry cos, all other lanes are sin(0)=0.
    emb = jnp.sin(ln_std * wf + phase)   # (TB, PAD)

    # First linear + tanh: one 128x128 matmul for the embedding rows plus two
    # rank-1 VPU updates for the two x input features (scaled by c_in).
    x0c = cond[:, 0:1] * c_in
    x1c = cond[:, 1:2] * c_in
    h = jnp.tanh(mm(emb, mats_ref[0]) + b1 + x0c * w1x0 + x1c * w1x1)
    # padded lanes of h are exactly 0 (zero-padded weights/bias, tanh(0)=0)

    # Lane mask so LayerNorm statistics ignore the 128-lane padding.
    lane = jax.lax.broadcasted_iota(jnp.int32, (1, PAD), 1)
    lane_mask = (lane < NHIDDEN).astype(f32)
    inv_n = jnp.float32(1.0 / NHIDDEN)

    # MLPResBlock x N_RES:  h = tanh(Linear(LayerNorm(h))) + h   (static unroll)
    for i in range(N_RES):
        gamma = rows[R_GAMMA + i:R_GAMMA + i + 1]   # padded lanes 0
        beta = rows[R_BETA + i:R_BETA + i + 1]
        b_fc = rows[R_FB + i:R_FB + i + 1]

        mu = jnp.sum(h, axis=-1, keepdims=True) * inv_n
        d = (h - mu) * lane_mask
        var = jnp.sum(d * d, axis=-1, keepdims=True) * inv_n
        hn = d * jax.lax.rsqrt(var + LN_EPS) * gamma + beta

        h = jnp.tanh(mm(hn, mats_ref[1 + i]) + b_fc) + h

    # Final Linear(50 -> 2); lanes >= NDIM of pred are exactly 0.
    pred = mm(h, mats_ref[1 + N_RES]) + bo          # (TB, PAD)

    # EDM output post-conditioning into the narrow (TB, 8) output.
    # Lanes >= NDIM pick up -cond*c_in2 garbage, but they are sliced off in the
    # wrapper, so we skip the mask.
    o_ref[...] = pred[:, :COND_W] * inv_std - cond * c_in2


def pack_params(params):
    """Pack logical params into one (16,128) row stack + one (5,128,128) slab stack."""
    f32 = jnp.float32
    w1 = params["w1"].astype(f32)                   # (NDIM + TIME_EMBED_DIM, NHIDDEN)
    wf = params["wf"].reshape(-1).astype(f32) * (2.0 * math.pi)   # (HALF,)

    rows = jnp.zeros((N_ROWS, PAD), f32)
    rows = rows.at[R_WF, NDIM:NDIM + HALF].set(wf)                       # sin lanes
    rows = rows.at[R_WF, NDIM + HALF:NDIM + 2 * HALF].set(wf)            # cos lanes
    rows = rows.at[R_PHASE, NDIM + HALF:NDIM + 2 * HALF].set(math.pi / 2.0)
    rows = rows.at[R_B1, :NHIDDEN].set(params["b1"].reshape(-1).astype(f32))
    rows = rows.at[R_BO, :NDIM].set(params["bo"].reshape(-1).astype(f32))
    rows = rows.at[R_W1X0, :NHIDDEN].set(w1[0])
    rows = rows.at[R_W1X1, :NHIDDEN].set(w1[1])
    rows = rows.at[R_GAMMA:R_GAMMA + N_RES, :NHIDDEN].set(params["gamma"].astype(f32))
    rows = rows.at[R_BETA:R_BETA + N_RES, :NHIDDEN].set(params["beta"].astype(f32))
    rows = rows.at[R_FB:R_FB + N_RES, :NHIDDEN].set(params["fb"].astype(f32))

    mats = jnp.zeros((N_MATS, PAD, PAD), f32)
    # w1 embedding rows placed at input rows 2..11 to line up with emb lanes 2..11
    mats = mats.at[0, NDIM:NDIM + TIME_EMBED_DIM, :NHIDDEN].set(w1[NDIM:])
    mats = mats.at[1:1 + N_RES, :NHIDDEN, :NHIDDEN].set(params["fw"].astype(f32))
    mats = mats.at[1 + N_RES, :NHIDDEN, :NDIM].set(params["wo"].astype(f32))

    return {"rows": rows, "mats": mats}


def score_model_forward(x, t, packed, *, block_b=512, matmul_dtype=jnp.float32):
    """Forward pass.  matmul_dtype=jnp.bfloat16 enables the fast MXU path on v6e/v7x
    (f32 accumulation kept); default f32 matches the reference to ~1e-6."""
    B = x.shape[0]
    f32 = jnp.float32
    x = x.astype(f32)
    t = t.reshape(-1, 1).astype(f32)

    # EDM / VE-SDE conditioning chain hoisted out of the kernel (runs in XLA,
    # frees the kernel's EUP slot from 1-lane-wide transcendental work).
    log_sigma = f32(math.log(SIGMA))
    std = jnp.sqrt((jnp.exp(2.0 * t * log_sigma) - 1.0) / (2.0 * log_sigma))  # (B,1)
    ln_std = jnp.log(std) * 0.25
    s2 = std * std
    c_in = 1.0 / jnp.sqrt(1.0 + s2)
    c_in2 = 1.0 / (1.0 + s2)
    inv_std = 1.0 / std

    cond_rows = jnp.concatenate(
        [x, ln_std, c_in, c_in2, inv_std,
         jnp.zeros((B, COND_W - NDIM - 4), f32)], axis=1)                     # (B, 8)

    TB = _choose_tb(B, block_b)
    B_pad = _round_up(B, TB)
    # Padded rows are all-zero: every in-kernel op on them stays finite.
    cond = jnp.zeros((B_pad, COND_W), f32).at[:B].set(cond_rows)

    rows = packed["rows"]
    mats = packed["mats"].astype(matmul_dtype)

    batched = lambda i: (i, 0)
    out = pl.pallas_call(
        score_model_kernel,
        out_shape=jax.ShapeDtypeStruct((B_pad, COND_W), f32),
        grid=(B_pad // TB,),
        in_specs=[
            pl.BlockSpec((TB, COND_W), batched),          # packed conditioning/input
            pl.BlockSpec((N_ROWS, PAD), lambda i: (0, 0)),          # row params (DMA'd once)
            pl.BlockSpec((N_MATS, PAD, PAD), lambda i: (0, 0, 0)),  # weight slabs (DMA'd once)
        ],
        out_specs=pl.BlockSpec((TB, COND_W), batched),
        compiler_params=pltpu.CompilerParams(dimension_semantics=("parallel",)),
    )(cond, rows, mats)
    return out[:B, :NDIM]


def init_params(key):
    """Logical (unpadded) parameters matching the PyTorch module layout."""
    ks = jax.random.split(key, 8)
    d_in = TIME_EMBED_DIM + NDIM
    return {
        # GaussianFourierProjection(embed_dim=10, scale=1): W ~ N(0, 1)
        "wf": jax.random.normal(ks[0], (1, HALF), jnp.float32),
        "w1": 0.2 * jax.random.normal(ks[1], (d_in, NHIDDEN), jnp.float32),
        "b1": 0.1 * jax.random.normal(ks[2], (1, NHIDDEN), jnp.float32),
        "gamma": jnp.ones((N_RES, NHIDDEN), jnp.float32),
        "beta": jnp.zeros((N_RES, NHIDDEN), jnp.float32),
        "fw": 0.1 * jax.random.normal(ks[3], (N_RES, NHIDDEN, NHIDDEN), jnp.float32),
        "fb": 0.05 * jax.random.normal(ks[4], (N_RES, NHIDDEN), jnp.float32),
        "wo": 0.2 * jax.random.normal(ks[5], (NHIDDEN, NDIM), jnp.float32),
        "bo": 0.05 * jax.random.normal(ks[6], (1, NDIM), jnp.float32),
    }


def reference_forward(x, t, p):
    """Pure-JAX reference reproducing the PyTorch forward semantics."""
    t = t.reshape(-1, 1)
    log_sigma = math.log(SIGMA)
    std = jnp.sqrt((jnp.exp(2.0 * t * log_sigma) - 1.0) / (2.0 * log_sigma))
    ln_std = jnp.log(std) / 4.0
    t_proj = ln_std * p["wf"] * 2.0 * math.pi
    t_embed = jnp.concatenate([jnp.sin(t_proj), jnp.cos(t_proj)], axis=-1)
    h = jnp.concatenate([x / jnp.sqrt(1.0 + std ** 2), t_embed], axis=1)
    h = jnp.tanh(h @ p["w1"] + p["b1"])
    for i in range(N_RES):
        mu = jnp.mean(h, axis=-1, keepdims=True)
        var = jnp.mean((h - mu) ** 2, axis=-1, keepdims=True)
        hn = (h - mu) / jnp.sqrt(var + LN_EPS) * p["gamma"][i] + p["beta"][i]
        h = jnp.tanh(hn @ p["fw"][i] + p["fb"][i]) + h
    pred = h @ p["wo"] + p["bo"]
    return pred / std - x / (1.0 + std ** 2)


if __name__ == "__main__":
    key = jax.random.PRNGKey(0)
    kx, kt, kp, kx2, kt2 = jax.random.split(key, 5)

    params = init_params(kp)
    packed = pack_params(params)

    # Small-batch test (single grid step).
    B = 8
    x = jax.random.normal(kx, (B, NDIM), jnp.float32)
    t = jax.random.uniform(kt, (B,), jnp.float32, minval=0.05, maxval=1.0)
    out = jax.block_until_ready(score_model_forward(x, t, packed))
    ref = reference_forward(x, t, params)
    assert out.shape == (B, NDIM)
    assert jnp.allclose(out, ref, atol=1e-4, rtol=1e-4), (out, ref)

    # Multi-tile test (exercises batch padding + a 2-step "parallel" grid).
    B2 = 200
    x2 = jax.random.normal(kx2, (B2, NDIM), jnp.float32)
    t2 = jax.random.uniform(kt2, (B2,), jnp.float32, minval=0.05, maxval=1.0)
    out2 = jax.block_until_ready(score_model_forward(x2, t2, packed))
    ref2 = reference_forward(x2, t2, params)
    assert out2.shape == (B2, NDIM)
    assert jnp.allclose(out2, ref2, atol=1e-4, rtol=1e-4), (out2, ref2)

    print("KERNEL_OK")
</pallas_src>

<mosaic_0001>
module attributes {stable_mosaic.version = 11 : i64} {
  func.func @score_model_kernel(%arg0: i32, %arg1: memref<8x8xf32, #tpu.memory_space<vmem>>, %arg2: memref<16x128xf32, #tpu.memory_space<vmem>>, %arg3: memref<5x128x128xf32, #tpu.memory_space<vmem>>, %arg4: memref<8x8xf32, #tpu.memory_space<vmem>>) attributes {dimension_semantics = [#tpu.dimension_semantics<parallel>], iteration_bounds = array<i64: 1>, scalar_prefetch = 0 : i64, scratch_operands = 0 : i64, tpu.core_type = #tpu.core_type<tc>, window_params = [{transform_indices = @transform_0, window_bounds = array<i64: 8, 8>}, {pipeline_mode = #tpu.pipeline_mode<synchronous>, transform_indices = @transform_1, window_bounds = array<i64: 16, 128>}, {pipeline_mode = #tpu.pipeline_mode<synchronous>, transform_indices = @transform_2, window_bounds = array<i64: 5, 128, 128>}, {transform_indices = @transform_3, window_bounds = array<i64: 8, 8>}]} {
    %c0 = arith.constant 0 : index
    %c0_0 = arith.constant 0 : index
    %0 = vector.load %arg1[%c0, %c0_0] : memref<8x8xf32, #tpu.memory_space<vmem>>, vector<8x8xf32>
    %1 = vector.extract_strided_slice %0 {offsets = [0, 2], sizes = [8, 1], strides = [1, 1]} : vector<8x8xf32> to vector<8x1xf32>
    %2 = vector.extract_strided_slice %0 {offsets = [0, 3], sizes = [8, 1], strides = [1, 1]} : vector<8x8xf32> to vector<8x1xf32>
    %3 = vector.extract_strided_slice %0 {offsets = [0, 4], sizes = [8, 1], strides = [1, 1]} : vector<8x8xf32> to vector<8x1xf32>
    %4 = vector.extract_strided_slice %0 {offsets = [0, 5], sizes = [8, 1], strides = [1, 1]} : vector<8x8xf32> to vector<8x1xf32>
    %c0_1 = arith.constant 0 : index
    %c0_2 = arith.constant 0 : index
    %5 = vector.load %arg2[%c0_1, %c0_2] : memref<16x128xf32, #tpu.memory_space<vmem>>, vector<16x128xf32>
    %6 = vector.extract_strided_slice %5 {offsets = [0, 0], sizes = [1, 128], strides = [1, 1]} : vector<16x128xf32> to vector<1x128xf32>
    %7 = vector.extract_strided_slice %5 {offsets = [1, 0], sizes = [1, 128], strides = [1, 1]} : vector<16x128xf32> to vector<1x128xf32>
    %8 = vector.extract_strided_slice %5 {offsets = [2, 0], sizes = [1, 128], strides = [1, 1]} : vector<16x128xf32> to vector<1x128xf32>
    %9 = vector.extract_strided_slice %5 {offsets = [3, 0], sizes = [1, 128], strides = [1, 1]} : vector<16x128xf32> to vector<1x128xf32>
    %10 = vector.extract_strided_slice %5 {offsets = [4, 0], sizes = [1, 128], strides = [1, 1]} : vector<16x128xf32> to vector<1x128xf32>
    %11 = vector.extract_strided_slice %5 {offsets = [5, 0], sizes = [1, 128], strides = [1, 1]} : vector<16x128xf32> to vector<1x128xf32>
    %12 = vector.broadcast %1 : vector<8x1xf32> to vector<8x128xf32>
    %13 = vector.broadcast %6 : vector<1x128xf32> to vector<8x128xf32>
    %14 = arith.mulf %12, %13 : vector<8x128xf32>
    %15 = vector.broadcast %7 : vector<1x128xf32> to vector<8x128xf32>
    %16 = arith.addf %14, %15 : vector<8x128xf32>
    %17 = math.sin %16 : vector<8x128xf32>
    %18 = vector.extract_strided_slice %0 {offsets = [0, 0], sizes = [8, 1], strides = [1, 1]} : vector<8x8xf32> to vector<8x1xf32>
    %19 = arith.mulf %18, %2 : vector<8x1xf32>
    %20 = vector.extract_strided_slice %0 {offsets = [0, 1], sizes = [8, 1], strides = [1, 1]} : vector<8x8xf32> to vector<8x1xf32>
    %21 = arith.mulf %20, %2 : vector<8x1xf32>
    %c0_3 = arith.constant 0 : index
    %c0_4 = arith.constant 0 : index
    %c0_5 = arith.constant 0 : index
    %22 = vector.load %arg3[%c0_3, %c0_4, %c0_5] : memref<5x128x128xf32, #tpu.memory_space<vmem>>, vector<1x128x128xf32>
    %23 = vector.shape_cast %22 : vector<1x128x128xf32> to vector<128x128xf32>
    %cst = arith.constant dense<0.000000e+00> : vector<8x128xf32>
    %24 = tpu.matmul %17, %23, %cst {dimension_numbers = #tpu.dot_dimension_numbers<[1], [0], [0], [1], [0, 0, 1, 1], [], []>} : vector<8x128xf32>, vector<128x128xf32>, vector<8x128xf32> -> vector<8x128xf32>
    %25 = vector.broadcast %8 : vector<1x128xf32> to vector<8x128xf32>
    %26 = arith.addf %24, %25 : vector<8x128xf32>
    %27 = vector.broadcast %19 : vector<8x1xf32> to vector<8x128xf32>
    %28 = vector.broadcast %10 : vector<1x128xf32> to vector<8x128xf32>
    %29 = arith.mulf %27, %28 : vector<8x128xf32>
    %30 = arith.addf %26, %29 : vector<8x128xf32>
    %31 = vector.broadcast %21 : vector<8x1xf32> to vector<8x128xf32>
    %32 = vector.broadcast %11 : vector<1x128xf32> to vector<8x128xf32>
    %33 = arith.mulf %31, %32 : vector<8x128xf32>
    %34 = arith.addf %30, %33 : vector<8x128xf32>
    %35 = math.tanh %34 : vector<8x128xf32>
    %36 = tpu.iota {dimensions = array<i32: 1>} : vector<1x128xi32>
    %c50_i32 = arith.constant 50 : i32
    %37 = vector.broadcast %c50_i32 : i32 to vector<1x128xi32>
    %38 = arith.cmpi slt, %36, %37 : vector<1x128xi32>
    %39 = arith.extui %38 : vector<1x128xi1> to vector<1x128xi32>
    %40 = arith.sitofp %39 : vector<1x128xi32> to vector<1x128xf32>
    %41 = vector.extract_strided_slice %5 {offsets = [6, 0], sizes = [1, 128], strides = [1, 1]} : vector<16x128xf32> to vector<1x128xf32>
    %42 = vector.extract_strided_slice %5 {offsets = [9, 0], sizes = [1, 128], strides = [1, 1]} : vector<16x128xf32> to vector<1x128xf32>
    %43 = vector.extract_strided_slice %5 {offsets = [12, 0], sizes = [1, 128], strides = [1, 1]} : vector<16x128xf32> to vector<1x128xf32>
    %cst_6 = arith.constant dense<0.000000e+00> : vector<8xf32>
    %44 = vector.multi_reduction <add>, %35, %cst_6 [1] : vector<8x128xf32> to vector<8xf32>
    %45 = vector.shape_cast %44 : vector<8xf32> to vector<8x1xf32>
    %cst_7 = arith.constant 2.000000e-02 : f32
    %46 = vector.broadcast %cst_7 : f32 to vector<8x1xf32>
    %47 = arith.mulf %45, %46 : vector<8x1xf32>
    %48 = vector.broadcast %47 : vector<8x1xf32> to vector<8x128xf32>
    %49 = arith.subf %35, %48 : vector<8x128xf32>
    %50 = vector.broadcast %40 : vector<1x128xf32> to vector<8x128xf32>
    %51 = arith.mulf %49, %50 : vector<8x128xf32>
    %52 = arith.mulf %51, %51 : vector<8x128xf32>
    %cst_8 = arith.constant dense<0.000000e+00> : vector<8xf32>
    %53 = vector.multi_reduction <add>, %52, %cst_8 [1] : vector<8x128xf32> to vector<8xf32>
    %54 = vector.shape_cast %53 : vector<8xf32> to vector<8x1xf32>
    %cst_9 = arith.constant 2.000000e-02 : f32
    %55 = vector.broadcast %cst_9 : f32 to vector<8x1xf32>
    %56 = arith.mulf %54, %55 : vector<8x1xf32>
    %cst_10 = arith.constant 9.99999974E-6 : f32
    %57 = vector.broadcast %cst_10 : f32 to vector<8x1xf32>
    %58 = arith.addf %56, %57 : vector<8x1xf32>
    %59 = math.rsqrt %58 : vector<8x1xf32>
    %60 = vector.broadcast %59 : vector<8x1xf32> to vector<8x128xf32>
    %61 = arith.mulf %51, %60 : vector<8x128xf32>
    %62 = vector.broadcast %41 : vector<1x128xf32> to vector<8x128xf32>
    %63 = arith.mulf %61, %62 : vector<8x128xf32>
    %64 = vector.broadcast %42 : vector<1x128xf32> to vector<8x128xf32>
    %65 = arith.addf %63, %64 : vector<8x128xf32>
    %c1 = arith.constant 1 : index
    %c0_11 = arith.constant 0 : index
    %c0_12 = arith.constant 0 : index
    %66 = vector.load %arg3[%c1, %c0_11, %c0_12] : memref<5x128x128xf32, #tpu.memory_space<vmem>>, vector<1x128x128xf32>
    %67 = vector.shape_cast %66 : vector<1x128x128xf32> to vector<128x128xf32>
    %cst_13 = arith.constant dense<0.000000e+00> : vector<8x128xf32>
    %68 = tpu.matmul %65, %67, %cst_13 {dimension_numbers = #tpu.dot_dimension_numbers<[1], [0], [0], [1], [0, 0, 1, 1], [], []>} : vector<8x128xf32>, vector<128x128xf32>, vector<8x128xf32> -> vector<8x128xf32>
    %69 = vector.broadcast %43 : vector<1x128xf32> to vector<8x128xf32>
    %70 = arith.addf %68, %69 : vector<8x128xf32>
    %71 = math.tanh %70 : vector<8x128xf32>
    %72 = arith.addf %71, %35 : vector<8x128xf32>
    %73 = vector.extract_strided_slice %5 {offsets = [7, 0], sizes = [1, 128], strides = [1, 1]} : vector<16x128xf32> to vector<1x128xf32>
    %74 = vector.extract_strided_slice %5 {offsets = [10, 0], sizes = [1, 128], strides = [1, 1]} : vector<16x128xf32> to vector<1x128xf32>
    %75 = vector.extract_strided_slice %5 {offsets = [13, 0], sizes = [1, 128], strides = [1, 1]} : vector<16x128xf32> to vector<1x128xf32>
    %cst_14 = arith.constant dense<0.000000e+00> : vector<8xf32>
    %76 = vector.multi_reduction <add>, %72, %cst_14 [1] : vector<8x128xf32> to vector<8xf32>
    %77 = vector.shape_cast %76 : vector<8xf32> to vector<8x1xf32>
    %cst_15 = arith.constant 2.000000e-02 : f32
    %78 = vector.broadcast %cst_15 : f32 to vector<8x1xf32>
    %79 = arith.mulf %77, %78 : vector<8x1xf32>
    %80 = vector.broadcast %79 : vector<8x1xf32> to vector<8x128xf32>
    %81 = arith.subf %72, %80 : vector<8x128xf32>
    %82 = vector.broadcast %40 : vector<1x128xf32> to vector<8x128xf32>
    %83 = arith.mulf %81, %82 : vector<8x128xf32>
    %84 = arith.mulf %83, %83 : vector<8x128xf32>
    %cst_16 = arith.constant dense<0.000000e+00> : vector<8xf32>
    %85 = vector.multi_reduction <add>, %84, %cst_16 [1] : vector<8x128xf32> to vector<8xf32>
    %86 = vector.shape_cast %85 : vector<8xf32> to vector<8x1xf32>
    %cst_17 = arith.constant 2.000000e-02 : f32
    %87 = vector.broadcast %cst_17 : f32 to vector<8x1xf32>
    %88 = arith.mulf %86, %87 : vector<8x1xf32>
    %cst_18 = arith.constant 9.99999974E-6 : f32
    %89 = vector.broadcast %cst_18 : f32 to vector<8x1xf32>
    %90 = arith.addf %88, %89 : vector<8x1xf32>
    %91 = math.rsqrt %90 : vector<8x1xf32>
    %92 = vector.broadcast %91 : vector<8x1xf32> to vector<8x128xf32>
    %93 = arith.mulf %83, %92 : vector<8x128xf32>
    %94 = vector.broadcast %73 : vector<1x128xf32> to vector<8x128xf32>
    %95 = arith.mulf %93, %94 : vector<8x128xf32>
    %96 = vector.broadcast %74 : vector<1x128xf32> to vector<8x128xf32>
    %97 = arith.addf %95, %96 : vector<8x128xf32>
    %c2 = arith.constant 2 : index
    %c0_19 = arith.constant 0 : index
    %c0_20 = arith.constant 0 : index
    %98 = vector.load %arg3[%c2, %c0_19, %c0_20] : memref<5x128x128xf32, #tpu.memory_space<vmem>>, vector<1x128x128xf32>
    %99 = vector.shape_cast %98 : vector<1x128x128xf32> to vector<128x128xf32>
    %cst_21 = arith.constant dense<0.000000e+00> : vector<8x128xf32>
    %100 = tpu.matmul %97, %99, %cst_21 {dimension_numbers = #tpu.dot_dimension_numbers<[1], [0], [0], [1], [0, 0, 1, 1], [], []>} : vector<8x128xf32>, vector<128x128xf32>, vector<8x128xf32> -> vector<8x128xf32>
    %101 = vector.broadcast %75 : vector<1x128xf32> to vector<8x128xf32>
    %102 = arith.addf %100, %101 : vector<8x128xf32>
    %103 = math.tanh %102 : vector<8x128xf32>
    %104 = arith.addf %103, %72 : vector<8x128xf32>
    %105 = vector.extract_strided_slice %5 {offsets = [8, 0], sizes = [1, 128], strides = [1, 1]} : vector<16x128xf32> to vector<1x128xf32>
    %106 = vector.extract_strided_slice %5 {offsets = [11, 0], sizes = [1, 128], strides = [1, 1]} : vector<16x128xf32> to vector<1x128xf32>
    %107 = vector.extract_strided_slice %5 {offsets = [14, 0], sizes = [1, 128], strides = [1, 1]} : vector<16x128xf32> to vector<1x128xf32>
    %cst_22 = arith.constant dense<0.000000e+00> : vector<8xf32>
    %108 = vector.multi_reduction <add>, %104, %cst_22 [1] : vector<8x128xf32> to vector<8xf32>
    %109 = vector.shape_cast %108 : vector<8xf32> to vector<8x1xf32>
    %cst_23 = arith.constant 2.000000e-02 : f32
    %110 = vector.broadcast %cst_23 : f32 to vector<8x1xf32>
    %111 = arith.mulf %109, %110 : vector<8x1xf32>
    %112 = vector.broadcast %111 : vector<8x1xf32> to vector<8x128xf32>
    %113 = arith.subf %104, %112 : vector<8x128xf32>
    %114 = vector.broadcast %40 : vector<1x128xf32> to vector<8x128xf32>
    %115 = arith.mulf %113, %114 : vector<8x128xf32>
    %116 = arith.mulf %115, %115 : vector<8x128xf32>
    %cst_24 = arith.constant dense<0.000000e+00> : vector<8xf32>
    %117 = vector.multi_reduction <add>, %116, %cst_24 [1] : vector<8x128xf32> to vector<8xf32>
    %118 = vector.shape_cast %117 : vector<8xf32> to vector<8x1xf32>
    %cst_25 = arith.constant 2.000000e-02 : f32
    %119 = vector.broadcast %cst_25 : f32 to vector<8x1xf32>
    %120 = arith.mulf %118, %119 : vector<8x1xf32>
    %cst_26 = arith.constant 9.99999974E-6 : f32
    %121 = vector.broadcast %cst_26 : f32 to vector<8x1xf32>
    %122 = arith.addf %120, %121 : vector<8x1xf32>
    %123 = math.rsqrt %122 : vector<8x1xf32>
    %124 = vector.broadcast %123 : vector<8x1xf32> to vector<8x128xf32>
    %125 = arith.mulf %115, %124 : vector<8x128xf32>
    %126 = vector.broadcast %105 : vector<1x128xf32> to vector<8x128xf32>
    %127 = arith.mulf %125, %126 : vector<8x128xf32>
    %128 = vector.broadcast %106 : vector<1x128xf32> to vector<8x128xf32>
    %129 = arith.addf %127, %128 : vector<8x128xf32>
    %c3 = arith.constant 3 : index
    %c0_27 = arith.constant 0 : index
    %c0_28 = arith.constant 0 : index
    %130 = vector.load %arg3[%c3, %c0_27, %c0_28] : memref<5x128x128xf32, #tpu.memory_space<vmem>>, vector<1x128x128xf32>
    %131 = vector.shape_cast %130 : vector<1x128x128xf32> to vector<128x128xf32>
    %cst_29 = arith.constant dense<0.000000e+00> : vector<8x128xf32>
    %132 = tpu.matmul %129, %131, %cst_29 {dimension_numbers = #tpu.dot_dimension_numbers<[1], [0], [0], [1], [0, 0, 1, 1], [], []>} : vector<8x128xf32>, vector<128x128xf32>, vector<8x128xf32> -> vector<8x128xf32>
    %133 = vector.broadcast %107 : vector<1x128xf32> to vector<8x128xf32>
    %134 = arith.addf %132, %133 : vector<8x128xf32>
    %135 = math.tanh %134 : vector<8x128xf32>
    %136 = arith.addf %135, %104 : vector<8x128xf32>
    %c4 = arith.constant 4 : index
    %c0_30 = arith.constant 0 : index
    %c0_31 = arith.constant 0 : index
    %137 = vector.load %arg3[%c4, %c0_30, %c0_31] : memref<5x128x128xf32, #tpu.memory_space<vmem>>, vector<1x128x128xf32>
    %138 = vector.shape_cast %137 : vector<1x128x128xf32> to vector<128x128xf32>
    %cst_32 = arith.constant dense<0.000000e+00> : vector<8x128xf32>
    %139 = tpu.matmul %136, %138, %cst_32 {dimension_numbers = #tpu.dot_dimension_numbers<[1], [0], [0], [1], [0, 0, 1, 1], [], []>} : vector<8x128xf32>, vector<128x128xf32>, vector<8x128xf32> -> vector<8x128xf32>
    %140 = vector.broadcast %9 : vector<1x128xf32> to vector<8x128xf32>
    %141 = arith.addf %139, %140 : vector<8x128xf32>
    %142 = vector.extract_strided_slice %141 {offsets = [0, 0], sizes = [8, 8], strides = [1, 1]} : vector<8x128xf32> to vector<8x8xf32>
    %143 = vector.broadcast %4 : vector<8x1xf32> to vector<8x8xf32>
    %144 = arith.mulf %142, %143 : vector<8x8xf32>
    %145 = vector.broadcast %3 : vector<8x1xf32> to vector<8x8xf32>
    %146 = arith.mulf %0, %145 : vector<8x8xf32>
    %147 = arith.subf %144, %146 : vector<8x8xf32>
    %c0_33 = arith.constant 0 : index
    %c0_34 = arith.constant 0 : index
    %148 = vector.load %arg4[%c0_33, %c0_34] : memref<8x8xf32, #tpu.memory_space<vmem>>, vector<8x8xf32>
    tpu.vector_store %arg4[%c0_33, %c0_34], %147 {strides = array<i32>} : memref<8x8xf32, #tpu.memory_space<vmem>>, vector<8x8xf32>,
    return
  }
  func.func @transform_0(%arg0: i32) -> (i32, i32) {
    %c0_i32 = arith.constant 0 : i32
    %c0_i32_0 = arith.constant 0 : i32
    return %arg0, %c0_i32 : i32, i32
  }
  func.func @transform_1(%arg0: i32) -> (i32, i32) {
    %c0_i32 = arith.constant 0 : i32
    %c0_i32_0 = arith.constant 0 : i32
    %c0_i32_1 = arith.constant 0 : i32
    return %c0_i32, %c0_i32_0 : i32, i32
  }
  func.func @transform_2(%arg0: i32) -> (i32, i32, i32) {
    %c0_i32 = arith.constant 0 : i32
    %c0_i32_0 = arith.constant 0 : i32
    %c0_i32_1 = arith.constant 0 : i32
    %c0_i32_2 = arith.constant 0 : i32
    return %c0_i32, %c0_i32_0, %c0_i32_1 : i32, i32, i32
  }
  func.func @transform_3(%arg0: i32) -> (i32, i32) {
    %c0_i32 = arith.constant 0 : i32
    %c0_i32_0 = arith.constant 0 : i32
    return %arg0, %c0_i32 : i32, i32
  }
}

</mosaic_0001>

<llo_original>
// kernel: tpu_custom_call.1
$region0: #{tpu_custom_call.1}
  #allocation0 [shape = 'u32[]', space=smem, size = 0x4, offset = 0x4, fixed_abs, tag = 'smem constant byte address 0x4 - core index']
  #allocation1 [shape = 'u32[144,128]{1,0:T(1,128)}', space=vmem, size = 0x12000, scoped, tag = 'internal scratch']
  %s0 = inlined_call_operand.hbm [shape: f32[8,8], index: 0, kind: input, shape index: {}]
  %s1 = inlined_call_operand.hbm [shape: f32[16,128], index: 1, kind: input, shape index: {}]
  %s2 = inlined_call_operand.hbm [shape: f32[5,128,128], index: 2, kind: input, shape index: {}]
  %s3 = inlined_call_operand.hbm [shape: f32[8,8], index: 3, kind: output, shape index: {}]
  %s4 = sld [smem:[#allocation0]]
  $region34: #{tpu_custom_call.1} parent=0
    _
  %s6 = ssub.s32 1, %s4
  %s7 = scalar_select 0, %s6, %s4
  $region1: #{tpu_custom_call.1} parent=0
    #allocation2 [shape = 'u8[4096]{0}', space=vmem, size = 0x1000, scoped, tag = 'input window, operand 0, single buffered']
    #allocation3 [shape = 's32[1]{0}', space=sflag, size = 0x4, scoped, tag = 'scoped memory for tpu_custom_call.1']
    #allocation4 [shape = 's32[1]{0}', space=sflag, size = 0x4, scoped, tag = 'scoped memory for tpu_custom_call.1']
    #allocation5 [shape = 'u8[8192]{0}', space=vmem, size = 0x2000, scoped, tag = 'input window, operand 1, single buffered']
    #allocation6 [shape = 's32[1]{0}', space=sflag, size = 0x4, scoped, tag = 'scoped memory for tpu_custom_call.1']
    #allocation7 [shape = 'u8[327680]{0}', space=vmem, size = 0x50000, scoped, tag = 'input window, operand 2, single buffered']
    #allocation8 [shape = 'u8[4096]{0}', space=vmem, size = 0x1000, scoped, tag = 'output window, operand 0, single buffered']
    %8 = vsyncpa [#allocation3], 0
    %9 = vsyncpa [#allocation6], 0
    %10 = vsyncpa [#allocation4], 0
    // Predicated region
    $region2: #{tpu_custom_call.1} parent=1 // pred_check
      _
    $region3: #{tpu_custom_call.1} parent=1 // pred_check_branch
      %12 = sbr.rel (0) target = $region5
    $region4: #{tpu_custom_call.1} parent=1 // pred_region
      %s14 = ssub.s32 128, 128
      %15 = vsyncadd [#allocation3], %s14
      %s17 = sshll.u32 [#allocation2], 4
      %s18 = int_to_ptr.vmem [resolvable:$true] %s17
      %20 = dma.hbm_to_vmem [thread:$0]  %s0, 128, %s18, [#allocation3]
    $region5: #{tpu_custom_call.1} parent=1 // pred_fallthru
      _
    // Predicated region
    $region6: #{tpu_custom_call.1} parent=1 // pred_check
      _
    $region7: #{tpu_custom_call.1} parent=1 // pred_check_branch
      %22 = sbr.rel (0) target = $region9
    $region8: #{tpu_custom_call.1} parent=1 // pred_region
      %s24 = ssub.s32 256, 256
      %25 = vsyncadd [#allocation6], %s24
      %s26 = sshll.u32 [#allocation5], 4
      %s27 = int_to_ptr.vmem [resolvable:$true] %s26
      %32 = dma.hbm_to_vmem [thread:$0]  %s1, 256, %s27, [#allocation6], 128, 128, 8
    $region9: #{tpu_custom_call.1} parent=1 // pred_fallthru
      _
    // Predicated region
    $region10: #{tpu_custom_call.1} parent=1 // pred_check
      _
    $region11: #{tpu_custom_call.1} parent=1 // pred_check_branch
      %34 = sbr.rel (0) target = $region13
    $region12: #{tpu_custom_call.1} parent=1 // pred_region
      %s36 = ssub.s32 10240, 10240
      %37 = vsyncadd [#allocation6], %s36
      %s38 = sshll.u32 [#allocation7], 4
      %s39 = int_to_ptr.vmem [resolvable:$true] %s38
      %44 = dma.hbm_to_vmem [thread:$0]  %s2, 10240, %s39, [#allocation6], 128, 128, 8
    $region13: #{tpu_custom_call.1} parent=1 // pred_fallthru
      _
    // Predicated region
    $region14: #{tpu_custom_call.1} parent=1 // pred_check
      _
    $region15: #{tpu_custom_call.1} parent=1 // pred_check_branch
      %46 = sbr.rel (0) target = $region17
    $region16: #{tpu_custom_call.1} parent=1 // pred_region
      %47 = dma.done [#allocation3], 128
    $region17: #{tpu_custom_call.1} parent=1 // pred_fallthru
      _
    // Predicated region
    $region18: #{tpu_custom_call.1} parent=1 // pred_check
      _
    $region19: #{tpu_custom_call.1} parent=1 // pred_check_branch
      %49 = sbr.rel (0) target = $region21
    $region20: #{tpu_custom_call.1} parent=1 // pred_region
      %50 = dma.done [#allocation6], 256
    $region21: #{tpu_custom_call.1} parent=1 // pred_fallthru
      _
    // Predicated region
    $region22: #{tpu_custom_call.1} parent=1 // pred_check
      _
    $region23: #{tpu_custom_call.1} parent=1 // pred_check_branch
      %52 = sbr.rel (0) target = $region25
    $region24: #{tpu_custom_call.1} parent=1 // pred_region
      %53 = dma.done [#allocation6], 10240
    $region25: #{tpu_custom_call.1} parent=1 // pred_fallthru
      _
    %v54 = vld [vmem:[#allocation2] sm:$0xff]
    %v55 = vld [vmem:[#allocation5] sm:$0xff]
    %v56 = vld [vmem:[#allocation5 + $0x8] sm:$0xff]
    %58 = vset.pattern.permute.xlu0 2
    %59 = vperm.xlu0 %58, %v54
    %v60 = vpop.permute.xlu0 %59
    %v62 = vlaneseq
    %v63 = vshrl.u32 %v62, 7
    %v64 = vsub.s32 0, %v63
    %v65 = vrot.slane %v55, %v64
    %v66 = vmul.f32 %v60, %v65
    %v67 = vlaneseq
    %v68 = vshrl.u32 %v67, 7
    %v69 = vsub.s32 1, %v68
    %v70 = vrot.slane %v55, %v69
    %v71 = vadd.f32 %v66, %v70
    %v72 = vand.u32 2147483647, %v71
    %vm73 = vcmp.le.f32.partialorder %v72, 0.7853982
    %vm74 = vcmp.lt.s32.totalorder %v71, 0
    %v75 = vand.u32 %v71, 2139095040
    %v76 = vshrl.u32 %v75, 23
    %v77 = vsub.s32 %v76, 127
    %v78 = vand.u32 2147483647, %v71
    %v79 = vand.u32 %v78, 8388607
    %v80 = vor.u32 %v79, 8388608
    %v81 = vsub.s32 0, %v80
    %v82 = vadd.s32 %v77, 1
    %vm83 = vcmp.gt.s32.totalorder %v82, 0
    %v84 = vsel %vm83, %v82, 0
    %v85 = vshrl.u32 %v84, 5
    %v86 = vand.u32 %v84, 31
    %v87 = vsub.s32 32, %v86
    %v88 = vshrl.u32 683565275, %v87
    %v89 = vshll.u32 683565275, %v86
    %v90 = vshrl.u32 2475754826, %v87
    %v91 = vor.u32 %v89, %v90
    %v92 = vshll.u32 2475754826, %v86
    %v93 = vshrl.u32 2131351028, %v87
    %v94 = vor.u32 %v92, %v93
    %v95 = vshll.u32 2131351028, %v86
    %v96 = vshrl.u32 2102212464, %v87
    %v97 = vor.u32 %v95, %v96
    %v98 = vshll.u32 2102212464, %v86
    %v99 = vshrl.u32 920167782, %v87
    %v100 = vor.u32 %v98, %v99
    %v101 = vshll.u32 920167782, %v86
    %v102 = vshrl.u32 1326507024, %v87
    %v103 = vor.u32 %v101, %v102
    %vm104 = vcmp.lt.s32.totalorder %v85, 1
    %vm105 = vcmp.lt.s32.totalorder %v85, 2
    %vm106 = vcmp.lt.s32.totalorder %v85, 3
    %vm107 = vcmp.lt.s32.totalorder %v85, 4
    %v108 = vsel %vm104, %v88, %v91
    %v109 = vsel %vm107, %v97, 2102212464
    %v110 = vsel %vm106, %v94, %v109
    %v111 = vsel %vm105, %v108, %v110
    %v112 = vsel %vm104, %v91, %v94
    %v113 = vsel %vm107, %v100, 920167782
    %v114 = vsel %vm106, %v97, %v113
    %v115 = vsel %vm105, %v112, %v114
    %v116 = vsel %vm104, %v94, %v97
    %v117 = vsel %vm107, %v103, 1326507024
    %v118 = vsel %vm106, %v100, %v117
    %v119 = vsel %vm105, %v116, %v118
    %v120 = vshll.u32 %v80, 8
    %v121 = vmul.u32.u64.compose %v120, %v119
    %v122 = vextract.low.u32 %v121
    %v123 = vextract.high.u32 %v121
    %v124 = vmul.u32.u64.compose %v120, %v115
    %v125 = vextract.low.u32 %v124
    %v126 = vextract.high.u32 %v124
    %v127 = vmul.u32 %v120, %v111
    %v128 = vadd.s32 %v123, %v125
    %vm129 = vc.u32 %v123, %v125
    %v130 = vadd.s32 %v126, 1
    %v131 = vsel %vm129, %v130, %v126
    %v132 = vadd.s32 %v127, %v131
    %v133 = vadd.s32 %v132, 536870912
    %v134 = vshrl.u32 %v133, 30
    %v135 = vshll.u32 %v134, 30
    %v136 = vsub.s32 %v132, %v135
    %vm137 = vcmp.lt.s32.totalorder %v136, 0
    %v138 = vsub.s32 0, %v136
    %v139 = vsel %vm137, %v138, %v136
    %v140 = vclz %v139
    %v141 = vsub.s32 %v140, 2
    %vm142 = vcmp.gt.s32.totalorder 0, %v141
    %v143 = vsel %vm142, 0, %v141
    %v144 = vsub.s32 32, %v143
    %v145 = vshll.u32 %v136, %v143
    %v146 = vshrl.u32 %v128, %v144
    %v147 = vor.u32 %v145, %v146
    %v148 = vsub.s32 4294967266, %v143
    %v149 = vadd.s32 %v148, 127
    %v150 = vshll.u32 %v149, 23
    %v151 = vor.u32 4788187, %v150
    %v152 = vand.u32 2147483647, %v151
    %v154 = vcvt.s32.f32 %v147
    %v155 = vmul.f32 %v154, %v152
    %v156 = vxor.u32 %v155, 2147483648
    %v157 = vsel %vm74, %v156, %v155
    %v158 = vsub.s32 4, %v134
    %v159 = vsel %vm74, %v158, %v134
    %v160 = vsel %vm73, %v71, %v157
    %v161 = vsel %vm73, 0, %v159
    %v162 = vcosq.f32.pop %v160
    %v163 = vsinq.f32.pop %v160
    %vm164 = vweird.f32 %v71
    %v165 = vadd.s32 %v161, 3
    %v166 = vand.u32 %v165, 3
    %vm167 = vcmp.lt.s32.totalorder %v166, 2
    %vm168 = vcmp.eq.s32.totalorder %v166, 0
    %v169 = vxor.u32 %v163, 2147483648
    %v170 = vsel %vm168, %v162, %v169
    %vm171 = vcmp.eq.s32.totalorder %v166, 2
    %v172 = vxor.u32 %v162, 2147483648
    %v173 = vsel %vm171, %v172, %v163
    %v174 = vsel %vm167, %v170, %v173
    %v175 = vsel %vm164, nan, %v174
    %176 = vrot.lane.b32.xlu0 %v54, 125
    %v177 = vpop.permute.xlu0 %176
    %v179 = vmul.f32 %v54, %v177
    %180 = vrot.lane.b32.xlu0 %v54, 126
    %v181 = vpop.permute.xlu0 %180
    %v183 = vmul.f32 %v54, %v181
    %v184 = vld [vmem:[#allocation7] sm:$0xff]
    %v185 = vld [vmem:[#allocation7 + $0x8] sm:$0xff]
    %v186 = vld [vmem:[#allocation7 + $0x10] sm:$0xff]
    %v187 = vld [vmem:[#allocation7 + $0x18] sm:$0xff]
    %v188 = vld [vmem:[#allocation7 + $0x20] sm:$0xff]
    %v189 = vld [vmem:[#allocation7 + $0x28] sm:$0xff]
    %v190 = vld [vmem:[#allocation7 + $0x30] sm:$0xff]
    %v191 = vld [vmem:[#allocation7 + $0x38] sm:$0xff]
    %v192 = vld [vmem:[#allocation7 + $0x40] sm:$0xff]
    %v193 = vld [vmem:[#allocation7 + $0x48] sm:$0xff]
    %v194 = vld [vmem:[#allocation7 + $0x50] sm:$0xff]
    %v195 = vld [vmem:[#allocation7 + $0x58] sm:$0xff]
    %v196 = vld [vmem:[#allocation7 + $0x60] sm:$0xff]
    %v197 = vld [vmem:[#allocation7 + $0x68] sm:$0xff]
    %v198 = vld [vmem:[#allocation7 + $0x70] sm:$0xff]
    %v199 = vld [vmem:[#allocation7 + $0x78] sm:$0xff]
    %v200 = vlaneseq
    %v201 = vshrl.u32 %v200, 7
    %v202 = vsub.s32 2, %v201
    %v203 = vrot.slane %v55, %v202
    %204 = vmatprep.subr.mxu0 0.0
    %205 = vmatpush1.msra.mxu0 %v184
    %206 = vmatprep.subr.mxu0 0.0
    %207 = vmatpush1.msra.mxu0 %v185
    %208 = vmatprep.subr.mxu0 0.0
    %209 = vmatpush1.msra.mxu0 %v186
    %210 = vmatprep.subr.mxu0 0.0
    %211 = vmatpush1.msra.mxu0 %v187
    %212 = vmatprep.subr.mxu0 0.0
    %213 = vmatpush1.msra.mxu0 %v188
    %214 = vmatprep.subr.mxu0 0.0
    %215 = vmatpush1.msra.mxu0 %v189
    %216 = vmatprep.subr.mxu0 0.0
    %217 = vmatpush1.msra.mxu0 %v190
    %218 = vmatprep.subr.mxu0 0.0
    %219 = vmatpush1.msra.mxu0 %v191
    %220 = vmatprep.subr.mxu0 0.0
    %221 = vmatpush1.msra.mxu0 %v192
    %222 = vmatprep.subr.mxu0 0.0
    %223 = vmatpush1.msra.mxu0 %v193
    %224 = vmatprep.subr.mxu0 0.0
    %225 = vmatpush1.msra.mxu0 %v194
    %226 = vmatprep.subr.mxu0 0.0
    %227 = vmatpush1.msra.mxu0 %v195
    %228 = vmatprep.subr.mxu0 0.0
    %229 = vmatpush1.msra.mxu0 %v196
    %230 = vmatprep.subr.mxu0 0.0
    %231 = vmatpush1.msra.mxu0 %v197
    %232 = vmatprep.subr.mxu0 0.0
    %233 = vmatpush1.msra.mxu0 %v198
    %234 = vmatprep.subr.mxu0 0.0
    %235 = vmatpush1.msra.mxu0 %v199
    %236 = vmatprep.subr.mxu0 0.0
    %237 = vmatpush1.msra.mxu0 0.0
    %238 = vmatprep.subr.mxu0 0.0
    %239 = vmatpush1.msra.mxu0 0.0
    %240 = vmatprep.subr.mxu0 0.0
    %241 = vmatpush1.msra.mxu0 0.0
    %242 = vmatprep.subr.mxu0 0.0
    %243 = vmatpush1.msra.mxu0 0.0
    %244 = vmatprep.subr.mxu0 0.0
    %245 = vmatpush1.msra.mxu0 0.0
    %246 = vmatprep.subr.mxu0 0.0
    %247 = vmatpush1.msra.mxu0 0.0
    %248 = vmatprep.subr.mxu0 0.0
    %249 = vmatpush1.msra.mxu0 0.0
    %250 = vmatprep.subr.mxu0 0.0
    %251 = vmatpush1.msra.mxu0 0.0
    %252 = vmatprep.subr.mxu0 0.0
    %253 = vmatpush1.msra.mxu0 0.0
    %254 = vmatprep.subr.mxu0 0.0
    %255 = vmatpush1.msra.mxu0 0.0
    %256 = vmatprep.subr.mxu0 0.0
    %257 = vmatpush1.msra.mxu0 0.0
    %258 = vmatprep.subr.mxu0 0.0
    %259 = vmatpush1.msra.mxu0 0.0
    %260 = vmatprep.subr.mxu0 0.0
    %261 = vmatpush1.msra.mxu0 0.0
    %262 = vmatprep.subr.mxu0 0.0
    %263 = vmatpush1.msra.mxu0 0.0
    %264 = vmatprep.subr.mxu0 0.0
    %265 = vmatpush1.msra.mxu0 0.0
    %266 = vmatprep.subr.mxu0 0.0
    %267 = vmatpush1.msra.mxu0 0.0
    %268 = vmatprep.mubr.f32.mxu0 0.0
    %269 = vmatmul.mubr.f32.gmra.mrb[0].mxu0 %v175
    %v270 = vpop.f32.mrb[0].mxu0
    %v271 = vadd.f32 %v203, %v270
    %v272 = vpop.f32.mrb[0].mxu0
    %273 = vdwg.mxu0
    %275 = vset.pattern.permute.xlu0 0
    %276 = vperm.xlu0 %275, %v179
    %v277 = vpop.permute.xlu0 %276
    %v279 = vlaneseq
    %v280 = vshrl.u32 %v279, 7
    %v281 = vsub.s32 4, %v280
    %v282 = vrot.slane %v55, %v281
    %v283 = vmul.f32 %v277, %v282
    %v284 = vadd.f32 %v271, %v283
    %286 = vset.pattern.permute.xlu0 1
    %287 = vperm.xlu0 %286, %v183
    %v288 = vpop.permute.xlu0 %287
    %v290 = vlaneseq
    %v291 = vshrl.u32 %v290, 7
    %v292 = vsub.s32 5, %v291
    %v293 = vrot.slane %v55, %v292
    %v294 = vmul.f32 %v288, %v293
    %v295 = vadd.f32 %v284, %v294
    %v296 = vtanh.pop %v295
    %v297 = vlaneseq
    %v298 = vand.u32 %v297, 127
    %vm299 = vcmp.lt.s32.totalorder %v298, 50
    %v300 = vsel %vm299, 1, 0
    %v301 = vcvt.s32.f32 %v300
    %302 = vadd.xlane.f32.xlu0 %v296
    %v303 = vpop.xlane.xlu0 %302
    %v304 = vmul.f32 %v303, 0.02
    %v305 = vsub.f32 %v296, %v304
    %v306 = vmul.f32 %v305, %v301
    %v307 = vmul.f32 %v306, %v306
    %308 = vadd.xlane.f32.xlu0 %v307
    %v309 = vpop.xlane.xlu0 %308
    %v310 = vmul.f32 %v309, 0.02
    %v311 = vadd.f32 %v310, 1e-05
    %v312 = vrsqrt.pop %v311
    %v313 = vmul.f32 %v306, %v312
    %v314 = vlaneseq
    %v315 = vshrl.u32 %v314, 7
    %v316 = vsub.s32 6, %v315
    %v317 = vrot.slane %v55, %v316
    %v318 = vmul.f32 %v313, %v317
    %v319 = vlaneseq
    %v320 = vshrl.u32 %v319, 7
    %v321 = vsub.s32 1, %v320
    %v322 = vrot.slane %v56, %v321
    %v323 = vadd.f32 %v318, %v322
    %s324 = scalar_lea.vmem [#allocation7], 128
    %v325 = vld [vmem:[%s324] sm:$0xff]
    %v326 = vld [vmem:[%s324 + $0x8] sm:$0xff]
    %v327 = vld [vmem:[%s324 + $0x10] sm:$0xff]
    %v328 = vld [vmem:[%s324 + $0x18] sm:$0xff]
    %v329 = vld [vmem:[%s324 + $0x20] sm:$0xff]
    %v330 = vld [vmem:[%s324 + $0x28] sm:$0xff]
    %v331 = vld [vmem:[%s324 + $0x30] sm:$0xff]
    %v332 = vld [vmem:[%s324 + $0x38] sm:$0xff]
    %v333 = vld [vmem:[%s324 + $0x40] sm:$0xff]
    %v334 = vld [vmem:[%s324 + $0x48] sm:$0xff]
    %v335 = vld [vmem:[%s324 + $0x50] sm:$0xff]
    %v336 = vld [vmem:[%s324 + $0x58] sm:$0xff]
    %v337 = vld [vmem:[%s324 + $0x60] sm:$0xff]
    %v338 = vld [vmem:[%s324 + $0x68] sm:$0xff]
    %v339 = vld [vmem:[%s324 + $0x70] sm:$0xff]
    %v340 = vld [vmem:[%s324 + $0x78] sm:$0xff]
    %v341 = vlaneseq
    %v342 = vshrl.u32 %v341, 7
    %v343 = vsub.s32 4, %v342
    %v344 = vrot.slane %v56, %v343
    %345 = vmatprep.subr.mxu0 0.0
    %346 = vmatpush1.msra.mxu0 %v325
    %347 = vmatprep.subr.mxu0 0.0
    %348 = vmatpush1.msra.mxu0 %v326
    %349 = vmatprep.subr.mxu0 0.0
    %350 = vmatpush1.msra.mxu0 %v327
    %351 = vmatprep.subr.mxu0 0.0
    %352 = vmatpush1.msra.mxu0 %v328
    %353 = vmatprep.subr.mxu0 0.0
    %354 = vmatpush1.msra.mxu0 %v329
    %355 = vmatprep.subr.mxu0 0.0
    %356 = vmatpush1.msra.mxu0 %v330
    %357 = vmatprep.subr.mxu0 0.0
    %358 = vmatpush1.msra.mxu0 %v331
    %359 = vmatprep.subr.mxu0 0.0
    %360 = vmatpush1.msra.mxu0 %v332
    %361 = vmatprep.subr.mxu0 0.0
    %362 = vmatpush1.msra.mxu0 %v333
    %363 = vmatprep.subr.mxu0 0.0
    %364 = vmatpush1.msra.mxu0 %v334
    %365 = vmatprep.subr.mxu0 0.0
    %366 = vmatpush1.msra.mxu0 %v335
    %367 = vmatprep.subr.mxu0 0.0
    %368 = vmatpush1.msra.mxu0 %v336
    %369 = vmatprep.subr.mxu0 0.0
    %370 = vmatpush1.msra.mxu0 %v337
    %371 = vmatprep.subr.mxu0 0.0
    %372 = vmatpush1.msra.mxu0 %v338
    %373 = vmatprep.subr.mxu0 0.0
    %374 = vmatpush1.msra.mxu0 %v339
    %375 = vmatprep.subr.mxu0 0.0
    %376 = vmatpush1.msra.mxu0 %v340
    %377 = vmatprep.subr.mxu0 0.0
    %378 = vmatpush1.msra.mxu0 0.0
    %379 = vmatprep.subr.mxu0 0.0
    %380 = vmatpush1.msra.mxu0 0.0
    %381 = vmatprep.subr.mxu0 0.0
    %382 = vmatpush1.msra.mxu0 0.0
    %383 = vmatprep.subr.mxu0 0.0
    %384 = vmatpush1.msra.mxu0 0.0
    %385 = vmatprep.subr.mxu0 0.0
    %386 = vmatpush1.msra.mxu0 0.0
    %387 = vmatprep.subr.mxu0 0.0
    %388 = vmatpush1.msra.mxu0 0.0
    %389 = vmatprep.subr.mxu0 0.0
    %390 = vmatpush1.msra.mxu0 0.0
    %391 = vmatprep.subr.mxu0 0.0
    %392 = vmatpush1.msra.mxu0 0.0
    %393 = vmatprep.subr.mxu0 0.0
    %394 = vmatpush1.msra.mxu0 0.0
    %395 = vmatprep.subr.mxu0 0.0
    %396 = vmatpush1.msra.mxu0 0.0
    %397 = vmatprep.subr.mxu0 0.0
    %398 = vmatpush1.msra.mxu0 0.0
    %399 = vmatprep.subr.mxu0 0.0
    %400 = vmatpush1.msra.mxu0 0.0
    %401 = vmatprep.subr.mxu0 0.0
    %402 = vmatpush1.msra.mxu0 0.0
    %403 = vmatprep.subr.mxu0 0.0
    %404 = vmatpush1.msra.mxu0 0.0
    %405 = vmatprep.subr.mxu0 0.0
    %406 = vmatpush1.msra.mxu0 0.0
    %407 = vmatprep.subr.mxu0 0.0
    %408 = vmatpush1.msra.mxu0 0.0
    %409 = vmatprep.mubr.f32.mxu0 0.0
    %410 = vmatmul.mubr.f32.gmra.mrb[0].mxu0 %v323
    %v411 = vpop.f32.mrb[0].mxu0
    %v412 = vadd.f32 %v344, %v411
    %v413 = vpop.f32.mrb[0].mxu0
    %414 = vdwg.mxu0
    %v415 = vtanh.pop %v412
    %v416 = vadd.f32 %v415, %v296
    %417 = vadd.xlane.f32.xlu0 %v416
    %v418 = vpop.xlane.xlu0 %417
    %v419 = vmul.f32 %v418, 0.02
    %v420 = vsub.f32 %v416, %v419
    %v421 = vmul.f32 %v420, %v301
    %v422 = vmul.f32 %v421, %v421
    %423 = vadd.xlane.f32.xlu0 %v422
    %v424 = vpop.xlane.xlu0 %423
    %v425 = vmul.f32 %v424, 0.02
    %v426 = vadd.f32 %v425, 1e-05
    %v427 = vrsqrt.pop %v426
    %v428 = vmul.f32 %v421, %v427
    %v429 = vlaneseq
    %v430 = vshrl.u32 %v429, 7
    %v431 = vsub.s32 7, %v430
    %v432 = vrot.slane %v55, %v431
    %v433 = vmul.f32 %v428, %v432
    %v434 = vlaneseq
    %v435 = vshrl.u32 %v434, 7
    %v436 = vsub.s32 2, %v435
    %v437 = vrot.slane %v56, %v436
    %v438 = vadd.f32 %v433, %v437
    %s439 = scalar_lea.vmem [#allocation7], 256
    %v440 = vld [vmem:[%s439] sm:$0xff]
    %v441 = vld [vmem:[%s439 + $0x8] sm:$0xff]
    %v442 = vld [vmem:[%s439 + $0x10] sm:$0xff]
    %v443 = vld [vmem:[%s439 + $0x18] sm:$0xff]
    %v444 = vld [vmem:[%s439 + $0x20] sm:$0xff]
    %v445 = vld [vmem:[%s439 + $0x28] sm:$0xff]
    %v446 = vld [vmem:[%s439 + $0x30] sm:$0xff]
    %v447 = vld [vmem:[%s439 + $0x38] sm:$0xff]
    %v448 = vld [vmem:[%s439 + $0x40] sm:$0xff]
    %v449 = vld [vmem:[%s439 + $0x48] sm:$0xff]
    %v450 = vld [vmem:[%s439 + $0x50] sm:$0xff]
    %v451 = vld [vmem:[%s439 + $0x58] sm:$0xff]
    %v452 = vld [vmem:[%s439 + $0x60] sm:$0xff]
    %v453 = vld [vmem:[%s439 + $0x68] sm:$0xff]
    %v454 = vld [vmem:[%s439 + $0x70] sm:$0xff]
    %v455 = vld [vmem:[%s439 + $0x78] sm:$0xff]
    %v456 = vlaneseq
    %v457 = vshrl.u32 %v456, 7
    %v458 = vsub.s32 5, %v457
    %v459 = vrot.slane %v56, %v458
    %460 = vmatprep.subr.mxu0 0.0
    %461 = vmatpush1.msra.mxu0 %v440
    %462 = vmatprep.subr.mxu0 0.0
    %463 = vmatpush1.msra.mxu0 %v441
    %464 = vmatprep.subr.mxu0 0.0
    %465 = vmatpush1.msra.mxu0 %v442
    %466 = vmatprep.subr.mxu0 0.0
    %467 = vmatpush1.msra.mxu0 %v443
    %468 = vmatprep.subr.mxu0 0.0
    %469 = vmatpush1.msra.mxu0 %v444
    %470 = vmatprep.subr.mxu0 0.0
    %471 = vmatpush1.msra.mxu0 %v445
    %472 = vmatprep.subr.mxu0 0.0
    %473 = vmatpush1.msra.mxu0 %v446
    %474 = vmatprep.subr.mxu0 0.0
    %475 = vmatpush1.msra.mxu0 %v447
    %476 = vmatprep.subr.mxu0 0.0
    %477 = vmatpush1.msra.mxu0 %v448
    %478 = vmatprep.subr.mxu0 0.0
    %479 = vmatpush1.msra.mxu0 %v449
    %480 = vmatprep.subr.mxu0 0.0
    %481 = vmatpush1.msra.mxu0 %v450
    %482 = vmatprep.subr.mxu0 0.0
    %483 = vmatpush1.msra.mxu0 %v451
    %484 = vmatprep.subr.mxu0 0.0
    %485 = vmatpush1.msra.mxu0 %v452
    %486 = vmatprep.subr.mxu0 0.0
    %487 = vmatpush1.msra.mxu0 %v453
    %488 = vmatprep.subr.mxu0 0.0
    %489 = vmatpush1.msra.mxu0 %v454
    %490 = vmatprep.subr.mxu0 0.0
    %491 = vmatpush1.msra.mxu0 %v455
    %492 = vmatprep.subr.mxu0 0.0
    %493 = vmatpush1.msra.mxu0 0.0
    %494 = vmatprep.subr.mxu0 0.0
    %495 = vmatpush1.msra.mxu0 0.0
    %496 = vmatprep.subr.mxu0 0.0
    %497 = vmatpush1.msra.mxu0 0.0
    %498 = vmatprep.subr.mxu0 0.0
    %499 = vmatpush1.msra.mxu0 0.0
    %500 = vmatprep.subr.mxu0 0.0
    %501 = vmatpush1.msra.mxu0 0.0
    %502 = vmatprep.subr.mxu0 0.0
    %503 = vmatpush1.msra.mxu0 0.0
    %504 = vmatprep.subr.mxu0 0.0
    %505 = vmatpush1.msra.mxu0 0.0
    %506 = vmatprep.subr.mxu0 0.0
    %507 = vmatpush1.msra.mxu0 0.0
    %508 = vmatprep.subr.mxu0 0.0
    %509 = vmatpush1.msra.mxu0 0.0
    %510 = vmatprep.subr.mxu0 0.0
    %511 = vmatpush1.msra.mxu0 0.0
    %512 = vmatprep.subr.mxu0 0.0
    %513 = vmatpush1.msra.mxu0 0.0
    %514 = vmatprep.subr.mxu0 0.0
    %515 = vmatpush1.msra.mxu0 0.0
    %516 = vmatprep.subr.mxu0 0.0
    %517 = vmatpush1.msra.mxu0 0.0
    %518 = vmatprep.subr.mxu0 0.0
    %519 = vmatpush1.msra.mxu0 0.0
    %520 = vmatprep.subr.mxu0 0.0
    %521 = vmatpush1.msra.mxu0 0.0
    %522 = vmatprep.subr.mxu0 0.0
    %523 = vmatpush1.msra.mxu0 0.0
    %524 = vmatprep.mubr.f32.mxu0 0.0
    %525 = vmatmul.mubr.f32.gmra.mrb[0].mxu0 %v438
    %v526 = vpop.f32.mrb[0].mxu0
    %v527 = vadd.f32 %v459, %v526
    %v528 = vpop.f32.mrb[0].mxu0
    %529 = vdwg.mxu0
    %v530 = vtanh.pop %v527
    %v531 = vadd.f32 %v530, %v416
    %532 = vadd.xlane.f32.xlu0 %v531
    %v533 = vpop.xlane.xlu0 %532
    %v534 = vmul.f32 %v533, 0.02
    %v535 = vsub.f32 %v531, %v534
    %v536 = vmul.f32 %v535, %v301
    %v537 = vmul.f32 %v536, %v536
    %538 = vadd.xlane.f32.xlu0 %v537
    %v539 = vpop.xlane.xlu0 %538
    %v540 = vmul.f32 %v539, 0.02
    %v541 = vadd.f32 %v540, 1e-05
    %v542 = vrsqrt.pop %v541
    %v543 = vmul.f32 %v536, %v542
    %v544 = vlaneseq
    %v545 = vshrl.u32 %v544, 7
    %v546 = vsub.s32 0, %v545
    %v547 = vrot.slane %v56, %v546
    %v548 = vmul.f32 %v543, %v547
    %v549 = vlaneseq
    %v550 = vshrl.u32 %v549, 7
    %v551 = vsub.s32 3, %v550
    %v552 = vrot.slane %v56, %v551
    %v553 = vadd.f32 %v548, %v552
    %s554 = scalar_lea.vmem [#allocation7], 384
    %v555 = vld [vmem:[%s554] sm:$0xff]
    %v556 = vld [vmem:[%s554 + $0x8] sm:$0xff]
    %v557 = vld [vmem:[%s554 + $0x10] sm:$0xff]
    %v558 = vld [vmem:[%s554 + $0x18] sm:$0xff]
    %v559 = vld [vmem:[%s554 + $0x20] sm:$0xff]
    %v560 = vld [vmem:[%s554 + $0x28] sm:$0xff]
    %v561 = vld [vmem:[%s554 + $0x30] sm:$0xff]
    %v562 = vld [vmem:[%s554 + $0x38] sm:$0xff]
    %v563 = vld [vmem:[%s554 + $0x40] sm:$0xff]
    %v564 = vld [vmem:[%s554 + $0x48] sm:$0xff]
    %v565 = vld [vmem:[%s554 + $0x50] sm:$0xff]
    %v566 = vld [vmem:[%s554 + $0x58] sm:$0xff]
    %v567 = vld [vmem:[%s554 + $0x60] sm:$0xff]
    %v568 = vld [vmem:[%s554 + $0x68] sm:$0xff]
    %v569 = vld [vmem:[%s554 + $0x70] sm:$0xff]
    %v570 = vld [vmem:[%s554 + $0x78] sm:$0xff]
    %v571 = vlaneseq
    %v572 = vshrl.u32 %v571, 7
    %v573 = vsub.s32 6, %v572
    %v574 = vrot.slane %v56, %v573
    %575 = vmatprep.subr.mxu0 0.0
    %576 = vmatpush1.msra.mxu0 %v555
    %577 = vmatprep.subr.mxu0 0.0
    %578 = vmatpush1.msra.mxu0 %v556
    %579 = vmatprep.subr.mxu0 0.0
    %580 = vmatpush1.msra.mxu0 %v557
    %581 = vmatprep.subr.mxu0 0.0
    %582 = vmatpush1.msra.mxu0 %v558
    %583 = vmatprep.subr.mxu0 0.0
    %584 = vmatpush1.msra.mxu0 %v559
    %585 = vmatprep.subr.mxu0 0.0
    %586 = vmatpush1.msra.mxu0 %v560
    %587 = vmatprep.subr.mxu0 0.0
    %588 = vmatpush1.msra.mxu0 %v561
    %589 = vmatprep.subr.mxu0 0.0
    %590 = vmatpush1.msra.mxu0 %v562
    %591 = vmatprep.subr.mxu0 0.0
    %592 = vmatpush1.msra.mxu0 %v563
    %593 = vmatprep.subr.mxu0 0.0
    %594 = vmatpush1.msra.mxu0 %v564
    %595 = vmatprep.subr.mxu0 0.0
    %596 = vmatpush1.msra.mxu0 %v565
    %597 = vmatprep.subr.mxu0 0.0
    %598 = vmatpush1.msra.mxu0 %v566
    %599 = vmatprep.subr.mxu0 0.0
    %600 = vmatpush1.msra.mxu0 %v567
    %601 = vmatprep.subr.mxu0 0.0
    %602 = vmatpush1.msra.mxu0 %v568
    %603 = vmatprep.subr.mxu0 0.0
    %604 = vmatpush1.msra.mxu0 %v569
    %605 = vmatprep.subr.mxu0 0.0
    %606 = vmatpush1.msra.mxu0 %v570
    %607 = vmatprep.subr.mxu0 0.0
    %608 = vmatpush1.msra.mxu0 0.0
    %609 = vmatprep.subr.mxu0 0.0
    %610 = vmatpush1.msra.mxu0 0.0
    %611 = vmatprep.subr.mxu0 0.0
    %612 = vmatpush1.msra.mxu0 0.0
    %613 = vmatprep.subr.mxu0 0.0
    %614 = vmatpush1.msra.mxu0 0.0
    %615 = vmatprep.subr.mxu0 0.0
    %616 = vmatpush1.msra.mxu0 0.0
    %617 = vmatprep.subr.mxu0 0.0
    %618 = vmatpush1.msra.mxu0 0.0
    %619 = vmatprep.subr.mxu0 0.0
    %620 = vmatpush1.msra.mxu0 0.0
    %621 = vmatprep.subr.mxu0 0.0
    %622 = vmatpush1.msra.mxu0 0.0
    %623 = vmatprep.subr.mxu0 0.0
    %624 = vmatpush1.msra.mxu0 0.0
    %625 = vmatprep.subr.mxu0 0.0
    %626 = vmatpush1.msra.mxu0 0.0
    %627 = vmatprep.subr.mxu0 0.0
    %628 = vmatpush1.msra.mxu0 0.0
    %629 = vmatprep.subr.mxu0 0.0
    %630 = vmatpush1.msra.mxu0 0.0
    %631 = vmatprep.subr.mxu0 0.0
    %632 = vmatpush1.msra.mxu0 0.0
    %633 = vmatprep.subr.mxu0 0.0
    %634 = vmatpush1.msra.mxu0 0.0
    %635 = vmatprep.subr.mxu0 0.0
    %636 = vmatpush1.msra.mxu0 0.0
    %637 = vmatprep.subr.mxu0 0.0
    %638 = vmatpush1.msra.mxu0 0.0
    %639 = vmatprep.mubr.f32.mxu0 0.0
    %640 = vmatmul.mubr.f32.gmra.mrb[0].mxu0 %v553
    %v641 = vpop.f32.mrb[0].mxu0
    %v642 = vadd.f32 %v574, %v641
    %v643 = vpop.f32.mrb[0].mxu0
    %644 = vdwg.mxu0
    %v645 = vtanh.pop %v642
    %v646 = vadd.f32 %v645, %v531
    %s647 = scalar_lea.vmem [#allocation7], 512
    %v648 = vld [vmem:[%s647] sm:$0xff]
    %v649 = vld [vmem:[%s647 + $0x8] sm:$0xff]
    %v650 = vld [vmem:[%s647 + $0x10] sm:$0xff]
    %v651 = vld [vmem:[%s647 + $0x18] sm:$0xff]
    %v652 = vld [vmem:[%s647 + $0x20] sm:$0xff]
    %v653 = vld [vmem:[%s647 + $0x28] sm:$0xff]
    %v654 = vld [vmem:[%s647 + $0x30] sm:$0xff]
    %v655 = vld [vmem:[%s647 + $0x38] sm:$0xff]
    %v656 = vld [vmem:[%s647 + $0x40] sm:$0xff]
    %v657 = vld [vmem:[%s647 + $0x48] sm:$0xff]
    %v658 = vld [vmem:[%s647 + $0x50] sm:$0xff]
    %v659 = vld [vmem:[%s647 + $0x58] sm:$0xff]
    %v660 = vld [vmem:[%s647 + $0x60] sm:$0xff]
    %v661 = vld [vmem:[%s647 + $0x68] sm:$0xff]
    %v662 = vld [vmem:[%s647 + $0x70] sm:$0xff]
    %v663 = vld [vmem:[%s647 + $0x78] sm:$0xff]
    %v664 = vlaneseq
    %v665 = vshrl.u32 %v664, 7
    %v666 = vsub.s32 3, %v665
    %v667 = vrot.slane %v55, %v666
    %668 = vmatprep.subr.mxu0 0.0
    %669 = vmatpush1.msra.mxu0 %v648
    %670 = vmatprep.subr.mxu0 0.0
    %671 = vmatpush1.msra.mxu0 %v649
    %672 = vmatprep.subr.mxu0 0.0
    %673 = vmatpush1.msra.mxu0 %v650
    %674 = vmatprep.subr.mxu0 0.0
    %675 = vmatpush1.msra.mxu0 %v651
    %676 = vmatprep.subr.mxu0 0.0
    %677 = vmatpush1.msra.mxu0 %v652
    %678 = vmatprep.subr.mxu0 0.0
    %679 = vmatpush1.msra.mxu0 %v653
    %680 = vmatprep.subr.mxu0 0.0
    %681 = vmatpush1.msra.mxu0 %v654
    %682 = vmatprep.subr.mxu0 0.0
    %683 = vmatpush1.msra.mxu0 %v655
    %684 = vmatprep.subr.mxu0 0.0
    %685 = vmatpush1.msra.mxu0 %v656
    %686 = vmatprep.subr.mxu0 0.0
    %687 = vmatpush1.msra.mxu0 %v657
    %688 = vmatprep.subr.mxu0 0.0
    %689 = vmatpush1.msra.mxu0 %v658
    %690 = vmatprep.subr.mxu0 0.0
    %691 = vmatpush1.msra.mxu0 %v659
    %692 = vmatprep.subr.mxu0 0.0
    %693 = vmatpush1.msra.mxu0 %v660
    %694 = vmatprep.subr.mxu0 0.0
    %695 = vmatpush1.msra.mxu0 %v661
    %696 = vmatprep.subr.mxu0 0.0
    %697 = vmatpush1.msra.mxu0 %v662
    %698 = vmatprep.subr.mxu0 0.0
    %699 = vmatpush1.msra.mxu0 %v663
    %700 = vmatprep.subr.mxu0 0.0
    %701 = vmatpush1.msra.mxu0 0.0
    %702 = vmatprep.subr.mxu0 0.0
    %703 = vmatpush1.msra.mxu0 0.0
    %704 = vmatprep.subr.mxu0 0.0
    %705 = vmatpush1.msra.mxu0 0.0
    %706 = vmatprep.subr.mxu0 0.0
    %707 = vmatpush1.msra.mxu0 0.0
    %708 = vmatprep.subr.mxu0 0.0
    %709 = vmatpush1.msra.mxu0 0.0
    %710 = vmatprep.subr.mxu0 0.0
    %711 = vmatpush1.msra.mxu0 0.0
    %712 = vmatprep.subr.mxu0 0.0
    %713 = vmatpush1.msra.mxu0 0.0
    %714 = vmatprep.subr.mxu0 0.0
    %715 = vmatpush1.msra.mxu0 0.0
    %716 = vmatprep.subr.mxu0 0.0
    %717 = vmatpush1.msra.mxu0 0.0
    %718 = vmatprep.subr.mxu0 0.0
    %719 = vmatpush1.msra.mxu0 0.0
    %720 = vmatprep.subr.mxu0 0.0
    %721 = vmatpush1.msra.mxu0 0.0
    %722 = vmatprep.subr.mxu0 0.0
    %723 = vmatpush1.msra.mxu0 0.0
    %724 = vmatprep.subr.mxu0 0.0
    %725 = vmatpush1.msra.mxu0 0.0
    %726 = vmatprep.subr.mxu0 0.0
    %727 = vmatpush1.msra.mxu0 0.0
    %728 = vmatprep.subr.mxu0 0.0
    %729 = vmatpush1.msra.mxu0 0.0
    %730 = vmatprep.subr.mxu0 0.0
    %731 = vmatpush1.msra.mxu0 0.0
    %732 = vmatprep.mubr.f32.mxu0 0.0
    %733 = vmatmul.mubr.f32.gmra.mrb[0].mxu0 %v646
    %v734 = vpop.f32.mrb[0].mxu0
    %v735 = vadd.f32 %v667, %v734
    %v736 = vpop.f32.mrb[0].mxu0
    %737 = vdwg.mxu0
    %738 = vset.pattern.permute.xlu0 5
    %739 = vperm.xlu0 %738, %v54
    %v740 = vpop.permute.xlu0 %739
    %v742 = vmul.f32 %v735, %v740
    %743 = vset.pattern.permute.xlu0 4
    %744 = vperm.xlu0 %743, %v54
    %v745 = vpop.permute.xlu0 %744
    %v747 = vmul.f32 %v54, %v745
    %v748 = vsub.f32 %v742, %v747
    %vm749 = vcmask 64512
    %750 = vst.msk [vmem:[#allocation8] sm:$0xff] %vm749, %v748
    // Predicated region
    $region26: #{tpu_custom_call.1} parent=1 // pred_check
      _
    $region27: #{tpu_custom_call.1} parent=1 // pred_check_branch
      %752 = sbr.rel (0) target = $region29
    $region28: #{tpu_custom_call.1} parent=1 // pred_region
      %s754 = ssub.s32 128, 128
      %755 = vsyncadd [#allocation4], %s754
      %s757 = sshll.u32 [#allocation8], 4
      %s758 = int_to_ptr.vmem [resolvable:$true] %s757
      %760 = dma.vmem_to_hbm [thread:$0]  %s758, 128, %s3, [#allocation4]
    $region29: #{tpu_custom_call.1} parent=1 // pred_fallthru
      _
    // Predicated region
    $region30: #{tpu_custom_call.1} parent=1 // pred_check
      _
    $region31: #{tpu_custom_call.1} parent=1 // pred_check_branch
      %762 = sbr.rel (0) target = $region33
    $region32: #{tpu_custom_call.1} parent=1 // pred_region
      %763 = dma.done [#allocation4], 128
    $region33: #{tpu_custom_call.1} parent=1 // pred_fallthru
      _
    %764 = vsyncpa [#allocation3], 1
    %765 = vsyncpa [#allocation6], 1
    %766 = vsyncpa [#allocation4], 1

</llo_original>
